<compile_context>
chip_gen: v5e
topology: v5e:2x2
jax: 0.10.0
libtpu: 0.0.40
codegen_flags: <defaults>
</compile_context>

<pallas_src>
import jax
import jax.numpy as jnp
from jax.experimental import pallas as pl
from jax.experimental.pallas import tpu as pltpu

HIDDEN = 128


def _round_up(x, m):
    return ((x + m - 1) // m) * m


def _choose_block_k(d_in):
    """K (contraction) tile. Must be a multiple of 128 or equal d_in."""
    if d_in <= 1024:
        return d_in
    for bk in (512, 256, 128):
        if d_in % bk == 0:
            return bk
    return d_in  # ragged large d_in: single K block (avoids a wrapper pad pass on x)


def _choose_block_b(B, block_k, d_out, vmem_budget_bytes):
    """Batch tile from a VMEM byte budget; >=2 grid steps when B is big; minimal padding."""
    if B < 8:
        return B  # full-array batch dim is a legal (un-padded) block
    align = 16 if B >= 16 else 8  # bf16 packs 2 rows/sublane -> prefer 16-row multiples
    # Per-row VMEM bytes: double-buffered f32 x tile + double-buffered bf16 out tile
    # + f32 (block_b, HIDDEN) accumulator scratch.
    per_row = 2 * block_k * 4 + 2 * d_out * 2 + HIDDEN * 4
    cap = max(align, (vmem_budget_bytes // per_row) // align * align)
    cap = min(cap, 2048)
    if B >= 64:
        # Guarantee at least two batch grid steps so both v7x TensorCores get work.
        half = _round_up(_round_up(B, align) // 2, align)
        cap = min(cap, max(align, half))
    n_steps = -(-_round_up(B, align) // cap)          # ceil
    block_b = _round_up(-(-B // n_steps), align)      # spread B evenly -> minimal padding
    return min(block_b, cap)


def policy_kernel(x_ref, w1_ref, w2_ref, o_ref, acc_ref):
    # x:   (block_b, block_k)  f32   (cast to bf16 in-kernel)
    # w1:  (block_k, HIDDEN)   bf16  (pre-transposed, lane-dense)
    # w2:  (HIDDEN, d_out)     bf16  (pre-transposed, lane-dense, un-padded)
    # acc: (block_b, HIDDEN)   f32   VMEM scratch, persists across the K axis
    k = pl.program_id(1)

    @pl.when(k == 0)
    def _init():
        acc_ref[...] = jnp.zeros_like(acc_ref)

    x = x_ref[...].astype(jnp.bfloat16)  # f32 -> bf16 on the VPU (no wrapper pass over x)
    acc_ref[...] += jnp.dot(x, w1_ref[...], preferred_element_type=jnp.float32)

    @pl.when(k == pl.num_programs(1) - 1)
    def _finalize():
        h = jnp.maximum(acc_ref[...], 0.0).astype(jnp.bfloat16)
        y = jnp.dot(h, w2_ref[...], preferred_element_type=jnp.float32)
        # sigmoid(y) == 0.5*tanh(0.5*y)+0.5 : single EUP transcendental, no VALU divide
        o_ref[...] = (0.5 * jnp.tanh(0.5 * y) + 0.5).astype(o_ref.dtype)


def policy_forward(x, w1, w2, *, block_b=None, vmem_budget_bytes=12 << 20):
    """x: (B, d_in) f32; w1: (HIDDEN, d_in) PyTorch layout; w2: (d_out, HIDDEN)."""
    B, d_in = x.shape
    d_out, hidden = w2.shape
    assert hidden == HIDDEN and w1.shape == (HIDDEN, d_in)

    block_k = _choose_block_k(d_in)
    if block_b is None:
        block_b = _choose_block_b(B, block_k, d_out, vmem_budget_bytes)

    n_b = -(-B // block_b)
    B_pad = n_b * block_b
    n_k = max(1, d_in // block_k)  # block_k divides d_in by construction

    # Weights: one-off transpose + bf16 cast (tiny arrays; keeps both matmuls lane-dense).
    w1t = w1.T.astype(jnp.bfloat16)  # (d_in, HIDDEN)
    w2t = w2.T.astype(jnp.bfloat16)  # (HIDDEN, d_out) -- NOT padded to 128

    # x stays f32 (cast in-kernel). Pad batch only when the tile doesn't divide B.
    xk = x if B_pad == B else jnp.pad(x, ((0, B_pad - B), (0, 0)))

    flops = 2 * B_pad * d_in * HIDDEN + 2 * B_pad * HIDDEN * d_out
    bytes_accessed = xk.size * 4 + w1t.size * 2 + w2t.size * 2 + B_pad * d_out * 2

    vmem_bytes = (2 * block_b * block_k * 4      # x tile, double-buffered, f32
                  + 2 * block_b * d_out * 2      # out tile, double-buffered, bf16
                  + block_b * HIDDEN * 4         # f32 accumulator scratch
                  + 2 * block_k * HIDDEN * 2     # w1 tile (double-buffered when K tiled)
                  + 2 * HIDDEN * d_out * 2)      # w2 tile
    vmem_limit_bytes = int(min(max(vmem_bytes + (4 << 20), 16 << 20), 32 << 20))

    out = pl.pallas_call(
        policy_kernel,
        out_shape=jax.ShapeDtypeStruct((B_pad, d_out), jnp.bfloat16),
        grid_spec=pltpu.PrefetchScalarGridSpec(
            num_scalar_prefetch=0,
            grid=(n_b, n_k),
            in_specs=[
                pl.BlockSpec((block_b, block_k), lambda i, k: (i, k)),  # x: batch x K tiles
                pl.BlockSpec((block_k, HIDDEN), lambda i, k: (k, 0)),   # w1: K-tiled, resident over batch
                pl.BlockSpec((HIDDEN, d_out), lambda i, k: (0, 0)),     # w2: fully resident
            ],
            out_specs=pl.BlockSpec((block_b, d_out), lambda i, k: (i, 0)),
            scratch_shapes=[pltpu.VMEM((block_b, HIDDEN), jnp.float32)],
        ),
        compiler_params=pltpu.CompilerParams(
            dimension_semantics=("parallel", "arbitrary"),
            vmem_limit_bytes=vmem_limit_bytes,
        ),
        cost_estimate=pl.CostEstimate(
            flops=flops,
            transcendentals=B_pad * d_out,
            bytes_accessed=bytes_accessed,
        ),
    )(xk, w1t, w2t)

    return out if B_pad == B else out[:B]


def reference_forward(x, w1, w2):
    """Same math as the kernel (bf16 operands, f32 accumulation, tanh-form sigmoid), f32 out."""
    xb = x.astype(jnp.bfloat16)
    w1b = w1.astype(jnp.bfloat16)
    w2b = w2.astype(jnp.bfloat16)
    h = jnp.dot(xb, w1b.T, preferred_element_type=jnp.float32)
    h = jnp.maximum(h, 0.0).astype(jnp.bfloat16)
    y = jnp.dot(h, w2b.T, preferred_element_type=jnp.float32)
    return 0.5 * jnp.tanh(0.5 * y) + 0.5


if __name__ == "__main__":
    # Small shapes consistent with the module's forward pass.
    batch = 8
    input_size = 32
    output_size = 16

    key = jax.random.PRNGKey(0)
    kx, k1, k2 = jax.random.split(key, 3)

    x = jax.random.normal(kx, (batch, input_size), dtype=jnp.float32)
    # Deterministic init mimicking nn.Linear (uniform, scaled by fan-in).
    w1 = jax.random.uniform(
        k1, (HIDDEN, input_size), dtype=jnp.float32,
        minval=-1.0, maxval=1.0) / jnp.sqrt(input_size)
    w2 = jax.random.uniform(
        k2, (output_size, HIDDEN), dtype=jnp.float32,
        minval=-1.0, maxval=1.0) / jnp.sqrt(HIDDEN)

    out = policy_forward(x, w1, w2)
    jax.block_until_ready(out)

    ref = reference_forward(x, w1, w2)
    assert out.shape == (batch, output_size)
    # Output is bf16 (sigmoid in [0,1]) -> tolerance loosened vs the old f32 output.
    err = jnp.max(jnp.abs(out.astype(jnp.float32) - ref))
    assert err < 1e-2, f"max abs err {err}"

    print("KERNEL_OK")
</pallas_src>

<mosaic_0001>
module attributes {stable_mosaic.version = 11 : i64} {
  func.func @policy_kernel(%arg0: i32, %arg1: i32, %arg2: memref<8x32xf32, #tpu.memory_space<vmem>>, %arg3: memref<32x128xbf16, #tpu.memory_space<vmem>>, %arg4: memref<128x16xbf16, #tpu.memory_space<vmem>>, %arg5: memref<8x16xbf16, #tpu.memory_space<vmem>>, %arg6: memref<8x128xf32, #tpu.memory_space<vmem>>) attributes {dimension_semantics = [#tpu.dimension_semantics<parallel>, #tpu.dimension_semantics<arbitrary>], iteration_bounds = array<i64: 1, 1>, scalar_prefetch = 0 : i64, scratch_operands = 1 : i64, tpu.core_type = #tpu.core_type<tc>, window_params = [{transform_indices = @transform_0, window_bounds = array<i64: 8, 32>}, {transform_indices = @transform_1, window_bounds = array<i64: 32, 128>}, {pipeline_mode = #tpu.pipeline_mode<synchronous>, transform_indices = @transform_2, window_bounds = array<i64: 128, 16>}, {transform_indices = @transform_3, window_bounds = array<i64: 8, 16>}]} {
    %c0_i32 = arith.constant 0 : i32
    %0 = arith.cmpi eq, %arg1, %c0_i32 : i32
    %1 = arith.extui %0 : i1 to i32
    %c0_i32_0 = arith.constant 0 : i32
    %2 = arith.cmpi ne, %1, %c0_i32_0 : i32
    scf.if %2 {
      %cst_10 = arith.constant 0.000000e+00 : f32
      %13 = vector.broadcast %cst_10 : f32 to vector<8x128xf32>
      %c0_11 = arith.constant 0 : index
      %c0_12 = arith.constant 0 : index
      %14 = vector.load %arg6[%c0_11, %c0_12] : memref<8x128xf32, #tpu.memory_space<vmem>>, vector<8x128xf32>
      tpu.vector_store %arg6[%c0_11, %c0_12], %13 {strides = array<i32>} : memref<8x128xf32, #tpu.memory_space<vmem>>, vector<8x128xf32>,
    } else {
    }
    %c0 = arith.constant 0 : index
    %c0_1 = arith.constant 0 : index
    %3 = vector.load %arg2[%c0, %c0_1] : memref<8x32xf32, #tpu.memory_space<vmem>>, vector<8x32xf32>
    %4 = arith.truncf %3 : vector<8x32xf32> to vector<8x32xbf16>
    %c0_2 = arith.constant 0 : index
    %c0_3 = arith.constant 0 : index
    %5 = vector.load %arg6[%c0_2, %c0_3] : memref<8x128xf32, #tpu.memory_space<vmem>>, vector<8x128xf32>
    %c0_4 = arith.constant 0 : index
    %c0_5 = arith.constant 0 : index
    %6 = vector.load %arg3[%c0_4, %c0_5] : memref<32x128xbf16, #tpu.memory_space<vmem>>, vector<32x128xbf16>
    %cst = arith.constant dense<0.000000e+00> : vector<8x128xf32>
    %7 = tpu.matmul %4, %6, %cst {dimension_numbers = #tpu.dot_dimension_numbers<[1], [0], [0], [1], [0, 0, 1, 1], [], []>} : vector<8x32xbf16>, vector<32x128xbf16>, vector<8x128xf32> -> vector<8x128xf32>
    %8 = arith.addf %5, %7 : vector<8x128xf32>
    %c0_6 = arith.constant 0 : index
    %c0_7 = arith.constant 0 : index
    %9 = vector.load %arg6[%c0_6, %c0_7] : memref<8x128xf32, #tpu.memory_space<vmem>>, vector<8x128xf32>
    tpu.vector_store %arg6[%c0_6, %c0_7], %8 {strides = array<i32>} : memref<8x128xf32, #tpu.memory_space<vmem>>, vector<8x128xf32>,
    %c0_i32_8 = arith.constant 0 : i32
    %10 = arith.cmpi eq, %arg1, %c0_i32_8 : i32
    %11 = arith.extui %10 : i1 to i32
    %c0_i32_9 = arith.constant 0 : i32
    %12 = arith.cmpi ne, %11, %c0_i32_9 : i32
    scf.if %12 {
      %c0_10 = arith.constant 0 : index
      %c0_11 = arith.constant 0 : index
      %13 = vector.load %arg6[%c0_10, %c0_11] : memref<8x128xf32, #tpu.memory_space<vmem>>, vector<8x128xf32>
      %cst_12 = arith.constant 0.000000e+00 : f32
      %14 = vector.broadcast %cst_12 : f32 to vector<8x128xf32>
      %15 = arith.maximumf %13, %14 : vector<8x128xf32>
      %16 = arith.truncf %15 : vector<8x128xf32> to vector<8x128xbf16>
      %c0_13 = arith.constant 0 : index
      %c0_14 = arith.constant 0 : index
      %17 = vector.load %arg4[%c0_13, %c0_14] : memref<128x16xbf16, #tpu.memory_space<vmem>>, vector<128x16xbf16>
      %cst_15 = arith.constant dense<0.000000e+00> : vector<8x16xf32>
      %18 = tpu.matmul %16, %17, %cst_15 {dimension_numbers = #tpu.dot_dimension_numbers<[1], [0], [0], [1], [0, 0, 1, 1], [], []>} : vector<8x128xbf16>, vector<128x16xbf16>, vector<8x16xf32> -> vector<8x16xf32>
      %cst_16 = arith.constant 5.000000e-01 : f32
      %19 = vector.broadcast %cst_16 : f32 to vector<8x16xf32>
      %20 = arith.mulf %19, %18 : vector<8x16xf32>
      %21 = math.tanh %20 : vector<8x16xf32>
      %cst_17 = arith.constant 5.000000e-01 : f32
      %22 = vector.broadcast %cst_17 : f32 to vector<8x16xf32>
      %23 = arith.mulf %22, %21 : vector<8x16xf32>
      %cst_18 = arith.constant 5.000000e-01 : f32
      %24 = vector.broadcast %cst_18 : f32 to vector<8x16xf32>
      %25 = arith.addf %23, %24 : vector<8x16xf32>
      %26 = arith.truncf %25 : vector<8x16xf32> to vector<8x16xbf16>
      %c0_19 = arith.constant 0 : index
      %c0_20 = arith.constant 0 : index
      %27 = vector.load %arg5[%c0_19, %c0_20] : memref<8x16xbf16, #tpu.memory_space<vmem>>, vector<8x16xbf16>
      tpu.vector_store %arg5[%c0_19, %c0_20], %26 {strides = array<i32>} : memref<8x16xbf16, #tpu.memory_space<vmem>>, vector<8x16xbf16>,
    } else {
    }
    return
  }
  func.func @transform_0(%arg0: i32, %arg1: i32) -> (i32, i32) {
    %c0_i32 = arith.constant 0 : i32
    return %arg0, %arg1 : i32, i32
  }
  func.func @transform_1(%arg0: i32, %arg1: i32) -> (i32, i32) {
    %c0_i32 = arith.constant 0 : i32
    %c0_i32_0 = arith.constant 0 : i32
    return %arg1, %c0_i32 : i32, i32
  }
  func.func @transform_2(%arg0: i32, %arg1: i32) -> (i32, i32) {
    %c0_i32 = arith.constant 0 : i32
    %c0_i32_0 = arith.constant 0 : i32
    %c0_i32_1 = arith.constant 0 : i32
    return %c0_i32, %c0_i32_0 : i32, i32
  }
  func.func @transform_3(%arg0: i32, %arg1: i32) -> (i32, i32) {
    %c0_i32 = arith.constant 0 : i32
    %c0_i32_0 = arith.constant 0 : i32
    return %arg0, %c0_i32 : i32, i32
  }
}

</mosaic_0001>

<llo_original>
// kernel: tpu_custom_call.1
$region0: #{tpu_custom_call.1}
  #allocation0 [shape = 'u32[]', space=smem, size = 0x4, offset = 0x4, fixed_abs, tag = 'smem constant byte address 0x4 - core index']
  #allocation1 [shape = 'u32[72,128]{1,0:T(1,128)}', space=vmem, size = 0x9000, scoped, tag = 'internal scratch']
  #allocation2 [shape = 'f32[8,128]{1,0:T(8,128)}', space=vmem, size = 0x1000, scoped, tag = 'scratch operand']
  %s0 = inlined_call_operand.vmem [shape: f32[8,32], index: 0, kind: input, shape index: {}]
  %s1 = inlined_call_operand.vmem [shape: bf16[32,128], index: 1, kind: input, shape index: {}]
  %s2 = inlined_call_operand.vmem [shape: bf16[128,16], index: 2, kind: input, shape index: {}]
  %s3 = inlined_call_operand.hbm [shape: bf16[8,16], index: 3, kind: output, shape index: {}]
  %s4 = sld [smem:[#allocation0]]
  $region30: #{tpu_custom_call.1} parent=0
    _
  %s6 = ssub.s32 1, %s4
  %s7 = scalar_select 0, %s6, %s4
  $region1: #{tpu_custom_call.1} parent=0
    #allocation3 [shape = 'u8[2048]{0}', space=vmem, size = 0x800, scoped, tag = 'output window, operand 0, single buffered']
    #allocation4 [shape = 's32[1]{0}', space=sflag, size = 0x4, scoped, tag = 'scoped memory for tpu_custom_call.1']
    %8 = vsyncpa [#allocation4], 0
    // Predicated region
    $region2: #{tpu_custom_call.1} parent=1 // pred_check
      _
    $region3: #{tpu_custom_call.1} parent=1 // pred_check_branch
      %10 = sbr.rel (0) target = $region5
    $region4: #{tpu_custom_call.1} parent=1 // pred_region
      _
    $region5: #{tpu_custom_call.1} parent=1 // pred_fallthru
      _
    // Predicated region
    $region6: #{tpu_custom_call.1} parent=1 // pred_check
      _
    $region7: #{tpu_custom_call.1} parent=1 // pred_check_branch
      %12 = sbr.rel (0) target = $region9
    $region8: #{tpu_custom_call.1} parent=1 // pred_region
      _
    $region9: #{tpu_custom_call.1} parent=1 // pred_fallthru
      _
    // Predicated region
    $region10: #{tpu_custom_call.1} parent=1 // pred_check
      _
    $region11: #{tpu_custom_call.1} parent=1 // pred_check_branch
      %14 = sbr.rel (0) target = $region13
    $region12: #{tpu_custom_call.1} parent=1 // pred_region
      _
    $region13: #{tpu_custom_call.1} parent=1 // pred_fallthru
      _
    %p16 = scmp.eq.s32.totalorder 0, 0
    // Predicated region
    $region14: #{tpu_custom_call.1} parent=1 // pred_check
      %p17 = pneg %p16
    $region15: #{tpu_custom_call.1} parent=1 // pred_check_branch
      %19 = sbr.rel (%p17) target = $region17
    $region16: #{tpu_custom_call.1} parent=1 // pred_region
      %20 = vst [vmem:[#allocation2] sm:$0xff] 0.0
    $region17: #{tpu_custom_call.1} parent=1 // pred_fallthru
      _
    %v21 = vld [vmem:[%s0] sm:$0xff]
    %v22 = vpack.c.bf16 %v21, %v21
    %v23 = vld [vmem:[#allocation2] sm:$0xff]
    %v24 = vld [vmem:[%s1] sm:$0xf]
    %v25 = vld [vmem:[%s1 + $0x4] sm:$0xf]
    %v26 = vld [vmem:[%s1 + $0x8] sm:$0xf]
    %v27 = vld [vmem:[%s1 + $0xc] sm:$0xf]
    %v32 = vunpack.c.l.b16 %v24
    %v33 = vunpack.c.l.b16 %v25
    %v34 = vunpack.c.l.b16 %v26
    %v35 = vunpack.c.l.b16 %v27
    %v36 = vpack.c.b16 %v33, %v32
    %v37 = vpack.c.b16 %v35, %v34
    %vm40 = vcmask 261120
    %v42 = vsel %vm40, %v22, 0
    %44 = vmatpush.bf16.msra.mxu0 0
    %45 = vmatpush.bf16.msra.mxu0 0
    %46 = vmatpush.bf16.msra.mxu0 0
    %47 = vmatpush.bf16.msra.mxu0 0
    %48 = vmatpush.bf16.msra.mxu0 0
    %49 = vmatpush.bf16.msra.mxu0 0
    %50 = vmatpush.bf16.msra.mxu0 %v37
    %51 = vmatpush.bf16.msra.mxu0 %v36
    %52 = vmatmul.bf16.gmra.mxu0 %v42
    %v53 = vpop.f32.mrf.mxu0
    %v54 = vadd.f32 0.0, %v53
    %v55 = vpop.f32.mrf.mxu0
    %56 = vdwg.mxu0
    %v57 = vadd.f32 %v23, %v54
    %58 = vst [vmem:[#allocation2] sm:$0xff] %v57
    // Predicated region
    $region18: #{tpu_custom_call.1} parent=1 // pred_check
      %p59 = pneg %p16
    $region19: #{tpu_custom_call.1} parent=1 // pred_check_branch
      %61 = sbr.rel (%p59) target = $region21
    $region20: #{tpu_custom_call.1} parent=1 // pred_region
      %v62 = vld [vmem:[#allocation2] sm:$0xff]
      %v63 = vmax.f32 %v62, 0.0
      %v64 = vpack.c.bf16 %v63, %v63
      %v65 = vld [vmem:[%s2] sm:$0xf]
      %v66 = vld [vmem:[%s2 + $0x4] sm:$0xf]
      %v67 = vld [vmem:[%s2 + $0x8] sm:$0xf]
      %v68 = vld [vmem:[%s2 + $0xc] sm:$0xf]
      %v69 = vld [vmem:[%s2 + $0x10] sm:$0xf]
      %v70 = vld [vmem:[%s2 + $0x14] sm:$0xf]
      %v71 = vld [vmem:[%s2 + $0x18] sm:$0xf]
      %v72 = vld [vmem:[%s2 + $0x1c] sm:$0xf]
      %v73 = vld [vmem:[%s2 + $0x20] sm:$0xf]
      %v74 = vld [vmem:[%s2 + $0x24] sm:$0xf]
      %v75 = vld [vmem:[%s2 + $0x28] sm:$0xf]
      %v76 = vld [vmem:[%s2 + $0x2c] sm:$0xf]
      %v77 = vld [vmem:[%s2 + $0x30] sm:$0xf]
      %v78 = vld [vmem:[%s2 + $0x34] sm:$0xf]
      %v79 = vld [vmem:[%s2 + $0x38] sm:$0xf]
      %v80 = vld [vmem:[%s2 + $0x3c] sm:$0xf]
      %v97 = vunpack.c.l.b16 %v65
      %v98 = vunpack.c.l.b16 %v66
      %v99 = vunpack.c.l.b16 %v67
      %v100 = vunpack.c.l.b16 %v68
      %v101 = vunpack.c.l.b16 %v69
      %v102 = vunpack.c.l.b16 %v70
      %v103 = vunpack.c.l.b16 %v71
      %v104 = vunpack.c.l.b16 %v72
      %v105 = vunpack.c.l.b16 %v73
      %v106 = vunpack.c.l.b16 %v74
      %v107 = vunpack.c.l.b16 %v75
      %v108 = vunpack.c.l.b16 %v76
      %v109 = vunpack.c.l.b16 %v77
      %v110 = vunpack.c.l.b16 %v78
      %v111 = vunpack.c.l.b16 %v79
      %v112 = vunpack.c.l.b16 %v80
      %v113 = vpack.c.b16 %v98, %v97
      %v114 = vpack.c.b16 %v100, %v99
      %v115 = vpack.c.b16 %v102, %v101
      %v116 = vpack.c.b16 %v104, %v103
      %v117 = vpack.c.b16 %v106, %v105
      %v118 = vpack.c.b16 %v108, %v107
      %v119 = vpack.c.b16 %v110, %v109
      %v120 = vpack.c.b16 %v112, %v111
      %129 = vmatpush.bf16.msra.mxu0 %v120
      %130 = vmatpush.bf16.msra.mxu0 %v119
      %131 = vmatpush.bf16.msra.mxu0 %v118
      %132 = vmatpush.bf16.msra.mxu0 %v117
      %133 = vmatpush.bf16.msra.mxu0 %v116
      %134 = vmatpush.bf16.msra.mxu0 %v115
      %135 = vmatpush.bf16.msra.mxu0 %v114
      %136 = vmatpush.bf16.msra.mxu0 %v113
      %137 = vmatmul.bf16.gmra.mxu0 %v64
      %v138 = vpop.f32.mrf.mxu0
      %v139 = vadd.f32 0.0, %v138
      %v140 = vpop.f32.mrf.mxu0
      %141 = vdwg.mxu0
      %v142 = vmul.f32 %v139, 0.5
      %v143 = vtanh.pop %v142
      %v144 = vmul.f32 %v143, 0.5
      %v145 = vadd.f32 %v144, 0.5
      %v146 = vpack.c.bf16 %v145, %v145
      %vm147 = vcmask 125952
      %148 = vst.msk [vmem:[#allocation3] sm:$0xf] %vm147, %v146
    $region21: #{tpu_custom_call.1} parent=1 // pred_fallthru
      _
    // Predicated region
    $region22: #{tpu_custom_call.1} parent=1 // pred_check
      _
    $region23: #{tpu_custom_call.1} parent=1 // pred_check_branch
      %150 = sbr.rel (0) target = $region25
    $region24: #{tpu_custom_call.1} parent=1 // pred_region
      %152 = vsyncadd [#allocation4], 0
      %s154 = sshll.u32 [#allocation3], 4
      %s155 = int_to_ptr.vmem [resolvable:$true] %s154
      %s156 = sshll.u32 %s3, 4
      %s157 = int_to_ptr.hbm [resolvable:$true] %s156
      %159 = dma.vmem_to_hbm [thread:$0]  %s155, 64, %s157, [#allocation4]
    $region25: #{tpu_custom_call.1} parent=1 // pred_fallthru
      _
    // Predicated region
    $region26: #{tpu_custom_call.1} parent=1 // pred_check
      _
    $region27: #{tpu_custom_call.1} parent=1 // pred_check_branch
      %161 = sbr.rel (0) target = $region29
    $region28: #{tpu_custom_call.1} parent=1 // pred_region
      %163 = dma.done [#allocation4], 64
    $region29: #{tpu_custom_call.1} parent=1 // pred_fallthru
      _
    %164 = vsyncpa [#allocation4], 1

</llo_original>
